<compile_context>
chip_gen: v6e
topology: v6e:2x2x1
jax: 0.10.0
libtpu: 0.0.40
codegen_flags: <defaults>
</compile_context>

<pallas_src>
import functools

import numpy as np

import jax
import jax.numpy as jnp
from jax.experimental import pallas as pl
from jax.experimental.pallas import tpu as pltpu


# ---------------------------------------------------------------------------
# Host-side (numpy) construction of the bilinear interpolation matrices
# (half-pixel centers, align_corners=False: cv2.INTER_LINEAR == A.Resize).
# ---------------------------------------------------------------------------
def _build_resize_matrix_np(out_size: int, in_size: int) -> np.ndarray:
    i = np.arange(out_size, dtype=np.float64)
    src = (i + 0.5) * (in_size / out_size) - 0.5
    src = np.clip(src, 0.0, in_size - 1.0)
    i0 = np.floor(src).astype(np.int64)
    w1 = src - i0
    i1 = np.minimum(i0 + 1, in_size - 1)
    m = np.zeros((out_size, in_size), np.float64)
    rows = np.arange(out_size)
    np.add.at(m, (rows, i0), 1.0 - w1)
    np.add.at(m, (rows, i1), w1)
    return m.astype(np.float32)


@functools.lru_cache(maxsize=None)
def _interp_constants(out_size: int, in_h: int, in_w: int, flip: bool,
                      integer_pixels: bool):
    """Host constants:
       rh_s : (2, S, H) f32  row-interp matrix with the per-channel scale
              folded in (idx 0: image 1/127.5, idx 1: depth 1/255).
       rwt  : (W, S)         col-interp matrix, transposed, flip folded in;
              bf16 iff weights are exactly bf16-representable AND pixels are
              integers (then the bf16 MXU path is bit-exact), else f32.
    """
    rh = _build_resize_matrix_np(out_size, in_h)            # (S, H)
    rw = _build_resize_matrix_np(out_size, in_w)            # (S, W)
    if flip:
        # HorizontalFlip of the *input* before resize == reverse Rw along W.
        rw = rw[:, ::-1]
    rwt = np.ascontiguousarray(rw.T)                        # (W, S) f32

    use_bf16 = False
    if integer_pixels:
        rwt_bf = rwt.astype(jnp.bfloat16).astype(np.float32)
        use_bf16 = bool(np.array_equal(rwt_bf, rwt))        # dyadic weights only
    if use_bf16:
        rwt = rwt.astype(jnp.bfloat16)

    rh_s = np.stack([rh * (1.0 / 127.5), rh * (1.0 / 255.0)],
                    axis=0).astype(np.float32)              # (2, S, H)
    return rh_s, rwt, use_bf16


# ---------------------------------------------------------------------------
# Pallas kernel: per-H-tile bilinear resize (2 matmuls per channel) with the
# output block used as the resident accumulator over the H-reduction axis.
# ---------------------------------------------------------------------------
def _resize_norm_kernel(img_ref, dep_ref, rwt_ref, rh_ref, oi_ref, od_ref,
                        *, n_img_ch: int, use_bf16: bool):
    # img_ref: (1, 3, TH, W)   native pixel dtype (uint8 / float)
    # dep_ref: (1, 1, TH, W)   native pixel dtype
    # rwt_ref: (W, S)          col-interp matrix (bf16 or f32), flip folded in
    # rh_ref:  (2, S, TH)      row-interp matrices with scales folded in (f32)
    # oi_ref:  (1, 3, S, S)    image output (f32), resident across the H axis
    # od_ref:  (1, 1, S, S)    depth output (f32), resident across the H axis
    h = pl.program_id(1)

    @pl.when(h == 0)
    def _init():
        # Accumulator init carries the additive part of the normalization:
        #   image: A.Normalize(0.5, 0.5) -> offset -1 ; depth: ToTensor -> 0.
        oi_ref[...] = jnp.full(oi_ref.shape, -1.0, jnp.float32)
        od_ref[...] = jnp.zeros(od_ref.shape, jnp.float32)

    rwt = rwt_ref[...]                      # (W, S)
    rh_img = rh_ref[0]                      # (S, TH) f32, 1/127.5 folded in
    rh_dep = rh_ref[1]                      # (S, TH) f32, 1/255   folded in

    def to_compute(x):
        # Per-tile upcast only (never a whole slab).  uint8 -> f32 is exact;
        # the optional bf16 step is exact for integer pixel values <= 255.
        if jnp.issubdtype(x.dtype, jnp.integer):
            x = x.astype(jnp.int32)
        x = x.astype(jnp.float32)
        return x.astype(jnp.bfloat16) if use_bf16 else x

    # Image channels: dominant W-contraction matmul, then accumulate the
    # H-contraction into the output-resident block (scale already in rh_img).
    for c in range(n_img_ch):
        x = to_compute(img_ref[0, c])                                   # (TH, W)
        t = jnp.dot(x, rwt, preferred_element_type=jnp.float32)         # (TH, S)
        oi_ref[0, c] += jnp.dot(rh_img, t, preferred_element_type=jnp.float32)

    # Depth channel (transforms.ToTensor: /255, no offset).
    xd = to_compute(dep_ref[0, 0])                                      # (TH, W)
    td = jnp.dot(xd, rwt, preferred_element_type=jnp.float32)           # (TH, S)
    od_ref[0, 0] += jnp.dot(rh_dep, td, preferred_element_type=jnp.float32)


# ---------------------------------------------------------------------------
# Tiling choice: keep double-buffered pixel blocks inside a v7x-safe budget.
# ---------------------------------------------------------------------------
def _choose_h_tile(in_h: int, in_w: int) -> int:
    if in_h <= 512:
        return in_h                          # one tile; batch axis still pipelines
    budget = 8 * 1024 * 1024                 # bytes per (image+depth) uint8 tile
    for th in (1024, 512, 256, 128):         # multiples of 128 keep rh / pixel
        if in_h % th == 0 and 4 * th * in_w <= budget:   # blocks tile-aligned
            return th
    # TODO(synk): ragged H with no 128-multiple divisor falls back to one tile.
    return in_h


# ---------------------------------------------------------------------------
# JAX wrappers.
# ---------------------------------------------------------------------------
@functools.partial(jax.jit, static_argnames=("image_size", "flip"))
def data_augmentation_v6_batch(images, depths, *, image_size: int,
                               flip: bool = False):
    """images: (N, 3, H, W), depths: (N, 1, H, W); uint8 (PIL-style) or float
    in [0, 255].  Returns:
        image_out (N, 3, S, S) float32 in [-1, 1]   (Normalize(0.5, 0.5))
        depth_out (N, 1, S, S) float32 in [0, 1]    (ToTensor)
    """
    n, c_img, in_h, in_w = images.shape
    c_dep = depths.shape[1]
    assert depths.shape[0] == n and depths.shape[2:] == (in_h, in_w)
    s = image_size

    integer_pixels = bool(jnp.issubdtype(images.dtype, jnp.integer)
                          and jnp.issubdtype(depths.dtype, jnp.integer))
    rh_s_np, rwt_np, use_bf16 = _interp_constants(
        s, in_h, in_w, bool(flip), integer_pixels)
    rh_s = jnp.asarray(rh_s_np)              # (2, S, H) f32 host constant
    rwt = jnp.asarray(rwt_np)                # (W, S)    bf16 or f32 constant

    th = _choose_h_tile(in_h, in_w)
    grid = (n, in_h // th)

    kernel = functools.partial(_resize_norm_kernel,
                               n_img_ch=c_img, use_bf16=use_bf16)

    out_img, out_dep = pl.pallas_call(
        kernel,
        out_shape=(jax.ShapeDtypeStruct((n, c_img, s, s), jnp.float32),
                   jax.ShapeDtypeStruct((n, c_dep, s, s), jnp.float32)),
        grid=grid,
        in_specs=[
            pl.BlockSpec((1, c_img, th, in_w), lambda b, h: (b, 0, h, 0)),  # image
            pl.BlockSpec((1, c_dep, th, in_w), lambda b, h: (b, 0, h, 0)),  # depth
            pl.BlockSpec((in_w, s), lambda b, h: (0, 0)),                   # Rw^T
            pl.BlockSpec((2, s, th), lambda b, h: (0, 0, h)),               # Rh (scaled)
        ],
        out_specs=(
            pl.BlockSpec((1, c_img, s, s), lambda b, h: (b, 0, 0, 0)),      # resident
            pl.BlockSpec((1, c_dep, s, s), lambda b, h: (b, 0, 0, 0)),      # accumulators
        ),
        compiler_params=pltpu.CompilerParams(
            dimension_semantics=("parallel", "arbitrary"),   # batch || , H reduction
            vmem_limit_bytes=48 * 1024 * 1024,               # safe on v5e/v6e/v7x
        ),
    )(images, depths, rwt, rh_s)

    return out_img, out_dep


def data_augmentation_v6(image, depth, *, image_size: int, flip: bool = False):
    """Single-sample API mirroring DataAugmentationV6.forward(image, depth)."""
    img_b, dep_b = data_augmentation_v6_batch(
        image[None], depth[None], image_size=image_size, flip=flip)
    return img_b[0], dep_b[0]


# ---------------------------------------------------------------------------
# Pure-JAX reference (same math) for a correctness check.
# ---------------------------------------------------------------------------
def _reference(images, depths, image_size, flip=False):
    x = jnp.concatenate([images, depths], axis=1).astype(jnp.float32)
    _, c, in_h, in_w = x.shape
    rh = jnp.asarray(_build_resize_matrix_np(image_size, in_h))
    rw = jnp.asarray(_build_resize_matrix_np(image_size, in_w))
    if flip:
        rw = rw[:, ::-1]
    resized = jnp.einsum("sh,nchw,tw->ncst", rh, x, rw)
    scale = jnp.array([1.0 / 127.5] * 3 + [1.0 / 255.0], jnp.float32).reshape(1, c, 1, 1)
    offset = jnp.array([-1.0] * 3 + [0.0], jnp.float32).reshape(1, c, 1, 1)
    out = resized * scale + offset
    return out[:, :3], out[:, 3:]


if __name__ == "__main__":
    key = jax.random.PRNGKey(0)
    k_img, k_dep = jax.random.split(key)

    N, H_IN, W_IN, IMAGE_SIZE = 2, 32, 32, 16

    # PIL-style uint8 pixel data, as the original module receives.
    images = jax.random.randint(k_img, (N, 3, H_IN, W_IN), 0, 256,
                                dtype=jnp.int32).astype(jnp.uint8)
    depths = jax.random.randint(k_dep, (N, 1, H_IN, W_IN), 0, 256,
                                dtype=jnp.int32).astype(jnp.uint8)

    for flip in (False, True):
        img_out, dep_out = data_augmentation_v6_batch(
            images, depths, image_size=IMAGE_SIZE, flip=flip)
        jax.block_until_ready(img_out)
        jax.block_until_ready(dep_out)

        ref_img, ref_dep = _reference(images, depths, IMAGE_SIZE, flip=flip)
        assert img_out.shape == (N, 3, IMAGE_SIZE, IMAGE_SIZE)
        assert dep_out.shape == (N, 1, IMAGE_SIZE, IMAGE_SIZE)
        assert jnp.allclose(img_out, ref_img, atol=1e-4, rtol=1e-4), float(
            jnp.max(jnp.abs(img_out - ref_img)))
        assert jnp.allclose(dep_out, ref_dep, atol=1e-4, rtol=1e-4), float(
            jnp.max(jnp.abs(dep_out - ref_dep)))

    # Single-sample API with float inputs (exercises the f32 weight fallback).
    img1, dep1 = data_augmentation_v6(images[0].astype(jnp.float32),
                                      depths[0].astype(jnp.float32),
                                      image_size=IMAGE_SIZE, flip=False)
    jax.block_until_ready(img1)
    ref_img, ref_dep = _reference(images[:1], depths[:1], IMAGE_SIZE, flip=False)
    assert jnp.allclose(img1, ref_img[0], atol=1e-4, rtol=1e-4)
    assert jnp.allclose(dep1, ref_dep[0], atol=1e-4, rtol=1e-4)

    print("KERNEL_OK")
</pallas_src>

<mosaic_0001>
module attributes {stable_mosaic.version = 11 : i64} {
  func.func @_resize_norm_kernel(%arg0: i32, %arg1: i32, %arg2: memref<1x3x32x32xi8, #tpu.memory_space<vmem>>, %arg3: memref<1x1x32x32xi8, #tpu.memory_space<vmem>>, %arg4: memref<32x16xbf16, #tpu.memory_space<vmem>>, %arg5: memref<2x16x32xf32, #tpu.memory_space<vmem>>, %arg6: memref<1x3x16x16xf32, #tpu.memory_space<vmem>>, %arg7: memref<1x1x16x16xf32, #tpu.memory_space<vmem>>) attributes {dimension_semantics = [#tpu.dimension_semantics<parallel>, #tpu.dimension_semantics<arbitrary>], iteration_bounds = array<i64: 2, 1>, scalar_prefetch = 0 : i64, scratch_operands = 0 : i64, tpu.core_type = #tpu.core_type<tc>, window_params = [{transform_indices = @transform_0, window_bounds = array<i64: 1, 3, 32, 32>}, {transform_indices = @transform_1, window_bounds = array<i64: 1, 1, 32, 32>}, {pipeline_mode = #tpu.pipeline_mode<synchronous>, transform_indices = @transform_2, window_bounds = array<i64: 32, 16>}, {transform_indices = @transform_3, window_bounds = array<i64: 2, 16, 32>}, {transform_indices = @transform_4, window_bounds = array<i64: 1, 3, 16, 16>}, {transform_indices = @transform_5, window_bounds = array<i64: 1, 1, 16, 16>}]} {
    %c0_i32 = arith.constant 0 : i32
    %0 = arith.cmpi eq, %arg1, %c0_i32 : i32
    %1 = arith.extui %0 : i1 to i32
    %c0_i32_0 = arith.constant 0 : i32
    %2 = arith.cmpi ne, %1, %c0_i32_0 : i32
    scf.if %2 {
      %cst_61 = arith.constant -1.000000e+00 : f32
      %60 = vector.broadcast %cst_61 : f32 to vector<1x3x16x16xf32>
      %c0_62 = arith.constant 0 : index
      %c0_63 = arith.constant 0 : index
      %c0_64 = arith.constant 0 : index
      %c0_65 = arith.constant 0 : index
      %61 = vector.load %arg6[%c0_62, %c0_63, %c0_64, %c0_65] : memref<1x3x16x16xf32, #tpu.memory_space<vmem>>, vector<1x3x16x16xf32>
      tpu.vector_store %arg6[%c0_62, %c0_63, %c0_64, %c0_65], %60 {strides = array<i32>} : memref<1x3x16x16xf32, #tpu.memory_space<vmem>>, vector<1x3x16x16xf32>,
      %cst_66 = arith.constant 0.000000e+00 : f32
      %62 = vector.broadcast %cst_66 : f32 to vector<1x1x16x16xf32>
      %c0_67 = arith.constant 0 : index
      %c0_68 = arith.constant 0 : index
      %c0_69 = arith.constant 0 : index
      %c0_70 = arith.constant 0 : index
      %63 = vector.load %arg7[%c0_67, %c0_68, %c0_69, %c0_70] : memref<1x1x16x16xf32, #tpu.memory_space<vmem>>, vector<1x1x16x16xf32>
      tpu.vector_store %arg7[%c0_67, %c0_68, %c0_69, %c0_70], %62 {strides = array<i32>} : memref<1x1x16x16xf32, #tpu.memory_space<vmem>>, vector<1x1x16x16xf32>,
    } else {
    }
    %c0 = arith.constant 0 : index
    %c0_1 = arith.constant 0 : index
    %3 = vector.load %arg4[%c0, %c0_1] : memref<32x16xbf16, #tpu.memory_space<vmem>>, vector<32x16xbf16>
    %c0_2 = arith.constant 0 : index
    %c0_3 = arith.constant 0 : index
    %c0_4 = arith.constant 0 : index
    %4 = vector.load %arg5[%c0_2, %c0_3, %c0_4] : memref<2x16x32xf32, #tpu.memory_space<vmem>>, vector<1x16x32xf32>
    %5 = vector.shape_cast %4 : vector<1x16x32xf32> to vector<16x32xf32>
    %c1 = arith.constant 1 : index
    %c0_5 = arith.constant 0 : index
    %c0_6 = arith.constant 0 : index
    %6 = vector.load %arg5[%c1, %c0_5, %c0_6] : memref<2x16x32xf32, #tpu.memory_space<vmem>>, vector<1x16x32xf32>
    %7 = vector.shape_cast %6 : vector<1x16x32xf32> to vector<16x32xf32>
    %c0_7 = arith.constant 0 : index
    %c0_8 = arith.constant 0 : index
    %c0_9 = arith.constant 0 : index
    %c0_10 = arith.constant 0 : index
    %8 = vector.load %arg2[%c0_7, %c0_8, %c0_9, %c0_10] : memref<1x3x32x32xi8, #tpu.memory_space<vmem>>, vector<1x1x32x32xi8>
    %9 = vector.shape_cast %8 : vector<1x1x32x32xi8> to vector<32x32xi8>
    %10 = arith.extui %9 : vector<32x32xi8> to vector<32x32xi32>
    %11 = arith.sitofp %10 : vector<32x32xi32> to vector<32x32xf32>
    %12 = arith.truncf %11 : vector<32x32xf32> to vector<32x32xbf16>
    %cst = arith.constant dense<0.000000e+00> : vector<32x16xf32>
    %13 = tpu.matmul %12, %3, %cst {dimension_numbers = #tpu.dot_dimension_numbers<[1], [0], [0], [1], [0, 0, 1, 1], [], []>} : vector<32x32xbf16>, vector<32x16xbf16>, vector<32x16xf32> -> vector<32x16xf32>
    %c0_11 = arith.constant 0 : index
    %c0_12 = arith.constant 0 : index
    %c0_13 = arith.constant 0 : index
    %c0_14 = arith.constant 0 : index
    %14 = vector.load %arg6[%c0_11, %c0_12, %c0_13, %c0_14] : memref<1x3x16x16xf32, #tpu.memory_space<vmem>>, vector<1x1x16x16xf32>
    %15 = vector.shape_cast %14 : vector<1x1x16x16xf32> to vector<16x16xf32>
    %cst_15 = arith.constant dense<0.000000e+00> : vector<16x16xf32>
    %16 = tpu.matmul %5, %13, %cst_15 {dimension_numbers = #tpu.dot_dimension_numbers<[1], [0], [0], [1], [0, 0, 1, 1], [], []>} : vector<16x32xf32>, vector<32x16xf32>, vector<16x16xf32> -> vector<16x16xf32>
    %17 = arith.addf %15, %16 : vector<16x16xf32>
    %c0_16 = arith.constant 0 : index
    %c0_17 = arith.constant 0 : index
    %c0_18 = arith.constant 0 : index
    %c0_19 = arith.constant 0 : index
    %18 = vector.load %arg6[%c0_16, %c0_17, %c0_18, %c0_19] : memref<1x3x16x16xf32, #tpu.memory_space<vmem>>, vector<1x1x16x16xf32>
    %19 = vector.shape_cast %18 : vector<1x1x16x16xf32> to vector<16x16xf32>
    %20 = vector.shape_cast %17 : vector<16x16xf32> to vector<1x1x16x16xf32>
    tpu.vector_store %arg6[%c0_16, %c0_17, %c0_18, %c0_19], %20 {strides = array<i32>} : memref<1x3x16x16xf32, #tpu.memory_space<vmem>>, vector<1x1x16x16xf32>,
    %c0_20 = arith.constant 0 : index
    %c1_21 = arith.constant 1 : index
    %c0_22 = arith.constant 0 : index
    %c0_23 = arith.constant 0 : index
    %21 = vector.load %arg2[%c0_20, %c1_21, %c0_22, %c0_23] : memref<1x3x32x32xi8, #tpu.memory_space<vmem>>, vector<1x1x32x32xi8>
    %22 = vector.shape_cast %21 : vector<1x1x32x32xi8> to vector<32x32xi8>
    %23 = arith.extui %22 : vector<32x32xi8> to vector<32x32xi32>
    %24 = arith.sitofp %23 : vector<32x32xi32> to vector<32x32xf32>
    %25 = arith.truncf %24 : vector<32x32xf32> to vector<32x32xbf16>
    %cst_24 = arith.constant dense<0.000000e+00> : vector<32x16xf32>
    %26 = tpu.matmul %25, %3, %cst_24 {dimension_numbers = #tpu.dot_dimension_numbers<[1], [0], [0], [1], [0, 0, 1, 1], [], []>} : vector<32x32xbf16>, vector<32x16xbf16>, vector<32x16xf32> -> vector<32x16xf32>
    %c0_25 = arith.constant 0 : index
    %c1_26 = arith.constant 1 : index
    %c0_27 = arith.constant 0 : index
    %c0_28 = arith.constant 0 : index
    %27 = vector.load %arg6[%c0_25, %c1_26, %c0_27, %c0_28] : memref<1x3x16x16xf32, #tpu.memory_space<vmem>>, vector<1x1x16x16xf32>
    %28 = vector.shape_cast %27 : vector<1x1x16x16xf32> to vector<16x16xf32>
    %cst_29 = arith.constant dense<0.000000e+00> : vector<16x16xf32>
    %29 = tpu.matmul %5, %26, %cst_29 {dimension_numbers = #tpu.dot_dimension_numbers<[1], [0], [0], [1], [0, 0, 1, 1], [], []>} : vector<16x32xf32>, vector<32x16xf32>, vector<16x16xf32> -> vector<16x16xf32>
    %30 = arith.addf %28, %29 : vector<16x16xf32>
    %c0_30 = arith.constant 0 : index
    %c1_31 = arith.constant 1 : index
    %c0_32 = arith.constant 0 : index
    %c0_33 = arith.constant 0 : index
    %31 = vector.load %arg6[%c0_30, %c1_31, %c0_32, %c0_33] : memref<1x3x16x16xf32, #tpu.memory_space<vmem>>, vector<1x1x16x16xf32>
    %32 = vector.shape_cast %31 : vector<1x1x16x16xf32> to vector<16x16xf32>
    %33 = vector.shape_cast %30 : vector<16x16xf32> to vector<1x1x16x16xf32>
    tpu.vector_store %arg6[%c0_30, %c1_31, %c0_32, %c0_33], %33 {strides = array<i32>} : memref<1x3x16x16xf32, #tpu.memory_space<vmem>>, vector<1x1x16x16xf32>,
    %c0_34 = arith.constant 0 : index
    %c2 = arith.constant 2 : index
    %c0_35 = arith.constant 0 : index
    %c0_36 = arith.constant 0 : index
    %34 = vector.load %arg2[%c0_34, %c2, %c0_35, %c0_36] : memref<1x3x32x32xi8, #tpu.memory_space<vmem>>, vector<1x1x32x32xi8>
    %35 = vector.shape_cast %34 : vector<1x1x32x32xi8> to vector<32x32xi8>
    %36 = arith.extui %35 : vector<32x32xi8> to vector<32x32xi32>
    %37 = arith.sitofp %36 : vector<32x32xi32> to vector<32x32xf32>
    %38 = arith.truncf %37 : vector<32x32xf32> to vector<32x32xbf16>
    %cst_37 = arith.constant dense<0.000000e+00> : vector<32x16xf32>
    %39 = tpu.matmul %38, %3, %cst_37 {dimension_numbers = #tpu.dot_dimension_numbers<[1], [0], [0], [1], [0, 0, 1, 1], [], []>} : vector<32x32xbf16>, vector<32x16xbf16>, vector<32x16xf32> -> vector<32x16xf32>
    %c0_38 = arith.constant 0 : index
    %c2_39 = arith.constant 2 : index
    %c0_40 = arith.constant 0 : index
    %c0_41 = arith.constant 0 : index
    %40 = vector.load %arg6[%c0_38, %c2_39, %c0_40, %c0_41] : memref<1x3x16x16xf32, #tpu.memory_space<vmem>>, vector<1x1x16x16xf32>
    %41 = vector.shape_cast %40 : vector<1x1x16x16xf32> to vector<16x16xf32>
    %cst_42 = arith.constant dense<0.000000e+00> : vector<16x16xf32>
    %42 = tpu.matmul %5, %39, %cst_42 {dimension_numbers = #tpu.dot_dimension_numbers<[1], [0], [0], [1], [0, 0, 1, 1], [], []>} : vector<16x32xf32>, vector<32x16xf32>, vector<16x16xf32> -> vector<16x16xf32>
    %43 = arith.addf %41, %42 : vector<16x16xf32>
    %c0_43 = arith.constant 0 : index
    %c2_44 = arith.constant 2 : index
    %c0_45 = arith.constant 0 : index
    %c0_46 = arith.constant 0 : index
    %44 = vector.load %arg6[%c0_43, %c2_44, %c0_45, %c0_46] : memref<1x3x16x16xf32, #tpu.memory_space<vmem>>, vector<1x1x16x16xf32>
    %45 = vector.shape_cast %44 : vector<1x1x16x16xf32> to vector<16x16xf32>
    %46 = vector.shape_cast %43 : vector<16x16xf32> to vector<1x1x16x16xf32>
    tpu.vector_store %arg6[%c0_43, %c2_44, %c0_45, %c0_46], %46 {strides = array<i32>} : memref<1x3x16x16xf32, #tpu.memory_space<vmem>>, vector<1x1x16x16xf32>,
    %c0_47 = arith.constant 0 : index
    %c0_48 = arith.constant 0 : index
    %c0_49 = arith.constant 0 : index
    %c0_50 = arith.constant 0 : index
    %47 = vector.load %arg3[%c0_47, %c0_48, %c0_49, %c0_50] : memref<1x1x32x32xi8, #tpu.memory_space<vmem>>, vector<1x1x32x32xi8>
    %48 = vector.shape_cast %47 : vector<1x1x32x32xi8> to vector<32x32xi8>
    %49 = arith.extui %48 : vector<32x32xi8> to vector<32x32xi32>
    %50 = arith.sitofp %49 : vector<32x32xi32> to vector<32x32xf32>
    %51 = arith.truncf %50 : vector<32x32xf32> to vector<32x32xbf16>
    %cst_51 = arith.constant dense<0.000000e+00> : vector<32x16xf32>
    %52 = tpu.matmul %51, %3, %cst_51 {dimension_numbers = #tpu.dot_dimension_numbers<[1], [0], [0], [1], [0, 0, 1, 1], [], []>} : vector<32x32xbf16>, vector<32x16xbf16>, vector<32x16xf32> -> vector<32x16xf32>
    %c0_52 = arith.constant 0 : index
    %c0_53 = arith.constant 0 : index
    %c0_54 = arith.constant 0 : index
    %c0_55 = arith.constant 0 : index
    %53 = vector.load %arg7[%c0_52, %c0_53, %c0_54, %c0_55] : memref<1x1x16x16xf32, #tpu.memory_space<vmem>>, vector<1x1x16x16xf32>
    %54 = vector.shape_cast %53 : vector<1x1x16x16xf32> to vector<16x16xf32>
    %cst_56 = arith.constant dense<0.000000e+00> : vector<16x16xf32>
    %55 = tpu.matmul %7, %52, %cst_56 {dimension_numbers = #tpu.dot_dimension_numbers<[1], [0], [0], [1], [0, 0, 1, 1], [], []>} : vector<16x32xf32>, vector<32x16xf32>, vector<16x16xf32> -> vector<16x16xf32>
    %56 = arith.addf %54, %55 : vector<16x16xf32>
    %c0_57 = arith.constant 0 : index
    %c0_58 = arith.constant 0 : index
    %c0_59 = arith.constant 0 : index
    %c0_60 = arith.constant 0 : index
    %57 = vector.load %arg7[%c0_57, %c0_58, %c0_59, %c0_60] : memref<1x1x16x16xf32, #tpu.memory_space<vmem>>, vector<1x1x16x16xf32>
    %58 = vector.shape_cast %57 : vector<1x1x16x16xf32> to vector<16x16xf32>
    %59 = vector.shape_cast %56 : vector<16x16xf32> to vector<1x1x16x16xf32>
    tpu.vector_store %arg7[%c0_57, %c0_58, %c0_59, %c0_60], %59 {strides = array<i32>} : memref<1x1x16x16xf32, #tpu.memory_space<vmem>>, vector<1x1x16x16xf32>,
    return
  }
  func.func @transform_0(%arg0: i32, %arg1: i32) -> (i32, i32, i32, i32) {
    %c0_i32 = arith.constant 0 : i32
    %c0_i32_0 = arith.constant 0 : i32
    %c0_i32_1 = arith.constant 0 : i32
    return %arg0, %c0_i32, %arg1, %c0_i32_0 : i32, i32, i32, i32
  }
  func.func @transform_1(%arg0: i32, %arg1: i32) -> (i32, i32, i32, i32) {
    %c0_i32 = arith.constant 0 : i32
    %c0_i32_0 = arith.constant 0 : i32
    %c0_i32_1 = arith.constant 0 : i32
    return %arg0, %c0_i32, %arg1, %c0_i32_0 : i32, i32, i32, i32
  }
  func.func @transform_2(%arg0: i32, %arg1: i32) -> (i32, i32) {
    %c0_i32 = arith.constant 0 : i32
    %c0_i32_0 = arith.constant 0 : i32
    %c0_i32_1 = arith.constant 0 : i32
    return %c0_i32, %c0_i32_0 : i32, i32
  }
  func.func @transform_3(%arg0: i32, %arg1: i32) -> (i32, i32, i32) {
    %c0_i32 = arith.constant 0 : i32
    %c0_i32_0 = arith.constant 0 : i32
    %c0_i32_1 = arith.constant 0 : i32
    return %c0_i32, %c0_i32_0, %arg1 : i32, i32, i32
  }
  func.func @transform_4(%arg0: i32, %arg1: i32) -> (i32, i32, i32, i32) {
    %c0_i32 = arith.constant 0 : i32
    %c0_i32_0 = arith.constant 0 : i32
    %c0_i32_1 = arith.constant 0 : i32
    %c0_i32_2 = arith.constant 0 : i32
    return %arg0, %c0_i32, %c0_i32_0, %c0_i32_1 : i32, i32, i32, i32
  }
  func.func @transform_5(%arg0: i32, %arg1: i32) -> (i32, i32, i32, i32) {
    %c0_i32 = arith.constant 0 : i32
    %c0_i32_0 = arith.constant 0 : i32
    %c0_i32_1 = arith.constant 0 : i32
    %c0_i32_2 = arith.constant 0 : i32
    return %arg0, %c0_i32, %c0_i32_0, %c0_i32_1 : i32, i32, i32, i32
  }
}

</mosaic_0001>

<llo_original>
// kernel: data_augmentation_v6_batch.1
$region0: #{data_augmentation_v6_batch.1}
  #allocation0 [shape = 'u32[]', space=smem, size = 0x4, offset = 0x4, fixed_abs, tag = 'smem constant byte address 0x4 - core index']
  #allocation1 [shape = 'u32[144,128]{1,0:T(1,128)}', space=vmem, size = 0x12000, scoped, tag = 'internal scratch']
  %s0 = inlined_call_operand.hbm [shape: u8[2,3,32,32], index: 0, kind: input, shape index: {}]
  %s1 = inlined_call_operand.hbm [shape: u8[2,1,32,32], index: 1, kind: input, shape index: {}]
  %s2 = inlined_call_operand.hbm [shape: bf16[32,16], index: 2, kind: input, shape index: {}]
  %s3 = inlined_call_operand.hbm [shape: f32[2,16,32], index: 3, kind: input, shape index: {}]
  %s4 = inlined_call_operand.hbm [shape: f32[2,3,16,16], index: 4, kind: output, shape index: {0}]
  %s5 = inlined_call_operand.hbm [shape: f32[2,1,16,16], index: 5, kind: output, shape index: {1}]
  %6 = xla_tuple %s4, %s5
  %s7 = sld [smem:[#allocation0]]
  $region77: #{data_augmentation_v6_batch.1} parent=0
    _
  %s9 = ssub.s32 1, %s7
  %s10 = scalar_select 0, %s9, %s7
  $region1: #{data_augmentation_v6_batch.1} parent=0
    #allocation2 [shape = 'u8[24576]{0}', space=vmem, size = 0x6000, scoped, tag = 'input window, operand 0']
    #allocation3 [shape = 's32[2]{0}', space=sflag, size = 0x8, scoped, tag = 'scoped memory for data_augmentation_v6_batch.1']
    #allocation4 [shape = 's32[2]{0}', space=sflag, size = 0x8, scoped, tag = 'scoped memory for data_augmentation_v6_batch.1']
    #allocation5 [shape = 'u8[8192]{0}', space=vmem, size = 0x2000, scoped, tag = 'input window, operand 1']
    #allocation6 [shape = 's32[2]{0}', space=sflag, size = 0x8, scoped, tag = 'scoped memory for data_augmentation_v6_batch.1']
    #allocation7 [shape = 'u8[8192]{0}', space=vmem, size = 0x2000, scoped, tag = 'input window, operand 2, single buffered']
    #allocation8 [shape = 'u8[16384]{0}', space=vmem, size = 0x4000, scoped, tag = 'input window, operand 3, single buffered']
    #allocation9 [shape = 's32[1]{0}', space=sflag, size = 0x4, scoped, tag = 'scoped memory for data_augmentation_v6_batch.1']
    #allocation10 [shape = 'u8[49152]{0}', space=vmem, size = 0xc000, scoped, tag = 'output window, operand 0']
    #allocation11 [shape = 'u8[16384]{0}', space=vmem, size = 0x4000, scoped, tag = 'output window, operand 1']
    #allocation12 [shape = 's32[2]{0}', space=sflag, size = 0x8, scoped, tag = 'scoped memory for data_augmentation_v6_batch.1']
    %11 = vsyncpa [#allocation3], 0
    %s12 = scalar_lea.sflag [#allocation3], 1
    %13 = vsyncpa %s12, 0
    %14 = vsyncpa [#allocation6], 0
    %s15 = scalar_lea.sflag [#allocation6], 1
    %16 = vsyncpa %s15, 0
    %17 = vsyncpa [#allocation9], 0
    %18 = vsyncpa [#allocation4], 0
    %s19 = scalar_lea.sflag [#allocation4], 1
    %20 = vsyncpa %s19, 0
    %21 = vsyncpa [#allocation12], 0
    %s22 = scalar_lea.sflag [#allocation12], 1
    %23 = vsyncpa %s22, 0
    loop: start=0, step=1, limit=4
    $region2: #{data_augmentation_v6_batch.1} parent=1 // loop_pre_header
      _
    $region3: #{data_augmentation_v6_batch.1} parent=1 // loop_header
      %s25 = sphi 0, %s29
      %p26 = scmp.ge.s32.totalorder %s25, 4
      %s32 = sphi 0, %s44
      %s33 = sphi 0, %s40
      %s34 = sphi 0, %s32
      %s35 = sphi 0, %s33
      %s36 = sphi 0, %s34
      %s37 = sphi 0, %s35
      %s49 = sphi 0, %s51
      %s52 = sphi 0, %s49
      %s53 = sphi 0, %s52
      %s69 = sphi 0, %s53
      %s77 = sphi 0, %s79
      %s80 = sphi 0, %s77
      %s81 = sphi 0, %s80
      %s97 = sphi 0, %s81
      %s101 = sphi 0, %s101
      %s103 = sphi 0, %s101
      %s104 = sphi 0, %s103
      %s118 = sphi 0, %s104
      %s124 = sphi 0, %s126
      %s127 = sphi 0, %s124
      %s128 = sphi 0, %s127
      %s144 = sphi 0, %s128
      %s150 = sphi 0, %s152
      %s153 = sphi 0, %s150
      %s154 = sphi 0, %s153
      %s170 = sphi 0, %s154
      %s176 = sphi 0, %s178
      %s179 = sphi 0, %s176
      %s180 = sphi 0, %s179
      %s196 = sphi 0, %s180
    $region4: #{data_augmentation_v6_batch.1} parent=1 // loop_header_branch
      %28 = sbr.rel (%p26) target = $region8
    $region5: #{data_augmentation_v6_batch.1} parent=1 // loop_body
      %s30 = ssub.s32 %s25, 1
      %s31 = ssub.s32 %s25, 2
      %s38 = sadd.s32 1, %s33
      %p39 = scmp.ge.s32.totalorder %s38, 1
      %s40 = scalar_select %p39, 0, %s38
      %s41 = sadd.s32 1, %s32
      %s42 = scalar_select %p39, %s41, %s32
      %p43 = scmp.ge.s32.totalorder %s42, 2
      %s44 = scalar_select %p43, 0, %s42
      %s45 = ssub.s32 %s32, %s44
      %s46 = ssub.s32 %s33, %s40
      %s47 = sor.u32 %s45, %s46
      %p48 = scmp.eq.s32.totalorder %s47, 0
      %s50 = sadd.s32 %s49, 1
      %s51 = scalar_select %p48, %s49, %s50
      %p54 = pneg %p48
      %p55 = scmp.eq.s32.totalorder %s25, 1
      %p56 = por %p54, %p55
      %p57 = scmp.ne.s32.totalorder %s49, %s52
      %p58 = scmp.eq.s32.totalorder %s25, 0
      %p59 = por %p57, %p58
      %p60 = scmp.ne.s32.totalorder %s49, %s52
      %p61 = scmp.eq.s32.totalorder %s30, 1
      %p62 = por %p60, %p61
      %p63 = scmp.ne.s32.totalorder %s52, %s53
      %p64 = scmp.eq.s32.totalorder %s30, 0
      %p65 = por %p63, %p64
      %p66 = scmp.ne.s32.totalorder %s52, %s53
      %p67 = scmp.eq.s32.totalorder %s31, 1
      %p68 = por %p66, %p67
      %p70 = scmp.ne.s32.totalorder %s53, %s69
      %p71 = scmp.eq.s32.totalorder %s31, 0
      %p72 = por %p70, %p71
      %s73 = ssub.s32 %s32, %s44
      %s74 = ssub.s32 %s33, %s40
      %s75 = sor.u32 %s73, %s74
      %p76 = scmp.eq.s32.totalorder %s75, 0
      %s78 = sadd.s32 %s77, 1
      %s79 = scalar_select %p76, %s77, %s78
      %p82 = pneg %p76
      %p83 = scmp.eq.s32.totalorder %s25, 1
      %p84 = por %p82, %p83
      %p85 = scmp.ne.s32.totalorder %s77, %s80
      %p86 = scmp.eq.s32.totalorder %s25, 0
      %p87 = por %p85, %p86
      %p88 = scmp.ne.s32.totalorder %s77, %s80
      %p89 = scmp.eq.s32.totalorder %s30, 1
      %p90 = por %p88, %p89
      %p91 = scmp.ne.s32.totalorder %s80, %s81
      %p92 = scmp.eq.s32.totalorder %s30, 0
      %p93 = por %p91, %p92
      %p94 = scmp.ne.s32.totalorder %s80, %s81
      %p95 = scmp.eq.s32.totalorder %s31, 1
      %p96 = por %p94, %p95
      %p98 = scmp.ne.s32.totalorder %s81, %s97
      %p99 = scmp.eq.s32.totalorder %s31, 0
      %p100 = por %p98, %p99
      %s102 = sadd.s32 %s101, 1
      %p105 = scmp.eq.s32.totalorder %s25, 1
      %p106 = scmp.ne.s32.totalorder %s101, %s103
      %p107 = scmp.eq.s32.totalorder %s25, 0
      %p108 = por %p106, %p107
      %p109 = scmp.ne.s32.totalorder %s101, %s103
      %p110 = scmp.eq.s32.totalorder %s30, 1
      %p111 = por %p109, %p110
      %p112 = scmp.ne.s32.totalorder %s103, %s104
      %p113 = scmp.eq.s32.totalorder %s30, 0
      %p114 = por %p112, %p113
      %p115 = scmp.ne.s32.totalorder %s103, %s104
      %p116 = scmp.eq.s32.totalorder %s31, 1
      %p117 = por %p115, %p116
      %p119 = scmp.ne.s32.totalorder %s104, %s118
      %p120 = scmp.eq.s32.totalorder %s31, 0
      %p121 = por %p119, %p120
      %s122 = ssub.s32 %s33, %s40
      %p123 = scmp.eq.s32.totalorder %s122, 0
      %s125 = sadd.s32 %s124, 1
      %s126 = scalar_select %p123, %s124, %s125
      %p129 = pneg %p123
      %p130 = scmp.eq.s32.totalorder %s25, 1
      %p131 = por %p129, %p130
      %p132 = scmp.ne.s32.totalorder %s124, %s127
      %p133 = scmp.eq.s32.totalorder %s25, 0
      %p134 = por %p132, %p133
      %p135 = scmp.ne.s32.totalorder %s124, %s127
      %p136 = scmp.eq.s32.totalorder %s30, 1
      %p137 = por %p135, %p136
      %p138 = scmp.ne.s32.totalorder %s127, %s128
      %p139 = scmp.eq.s32.totalorder %s30, 0
      %p140 = por %p138, %p139
      %p141 = scmp.ne.s32.totalorder %s127, %s128
      %p142 = scmp.eq.s32.totalorder %s31, 1
      %p143 = por %p141, %p142
      %p145 = scmp.ne.s32.totalorder %s128, %s144
      %p146 = scmp.eq.s32.totalorder %s31, 0
      %p147 = por %p145, %p146
      %s148 = ssub.s32 %s32, %s44
      %p149 = scmp.eq.s32.totalorder %s148, 0
      %s151 = sadd.s32 %s150, 1
      %s152 = scalar_select %p149, %s150, %s151
      %p155 = pneg %p149
      %p156 = scmp.eq.s32.totalorder %s25, 1
      %p157 = por %p155, %p156
      %p158 = scmp.ne.s32.totalorder %s150, %s153
      %p159 = scmp.eq.s32.totalorder %s25, 0
      %p160 = por %p158, %p159
      %p161 = scmp.ne.s32.totalorder %s150, %s153
      %p162 = scmp.eq.s32.totalorder %s30, 1
      %p163 = por %p161, %p162
      %p164 = scmp.ne.s32.totalorder %s153, %s154
      %p165 = scmp.eq.s32.totalorder %s30, 0
      %p166 = por %p164, %p165
      %p167 = scmp.ne.s32.totalorder %s153, %s154
      %p168 = scmp.eq.s32.totalorder %s31, 1
      %p169 = por %p167, %p168
      %p171 = scmp.ne.s32.totalorder %s154, %s170
      %p172 = scmp.eq.s32.totalorder %s31, 0
      %p173 = por %p171, %p172
      %s174 = ssub.s32 %s32, %s44
      %p175 = scmp.eq.s32.totalorder %s174, 0
      %s177 = sadd.s32 %s176, 1
      %s178 = scalar_select %p175, %s176, %s177
      %p181 = pneg %p175
      %p182 = scmp.eq.s32.totalorder %s25, 1
      %p183 = por %p181, %p182
      %p184 = scmp.ne.s32.totalorder %s176, %s179
      %p185 = scmp.eq.s32.totalorder %s25, 0
      %p186 = por %p184, %p185
      %p187 = scmp.ne.s32.totalorder %s176, %s179
      %p188 = scmp.eq.s32.totalorder %s30, 1
      %p189 = por %p187, %p188
      %p190 = scmp.ne.s32.totalorder %s179, %s180
      %p191 = scmp.eq.s32.totalorder %s30, 0
      %p192 = por %p190, %p191
      %p193 = scmp.ne.s32.totalorder %s179, %s180
      %p194 = scmp.eq.s32.totalorder %s31, 1
      %p195 = por %p193, %p194
      %p197 = scmp.ne.s32.totalorder %s180, %s196
      %p198 = scmp.eq.s32.totalorder %s31, 0
      %p199 = por %p197, %p198
      %p200 = scmp.le.s32.totalorder 1, %s25
      %p201 = scmp.lt.s32.totalorder %s25, 3
      %p202 = pnand %p200, %p201
      %p203 = pneg %p202
      // Predicated region
      $region9: #{data_augmentation_v6_batch.1} parent=5 // pred_check
        _
      $region10: #{data_augmentation_v6_batch.1} parent=5 // pred_check_branch
        %205 = sbr.rel (%p202) target = $region12
      $region11: #{data_augmentation_v6_batch.1} parent=5 // pred_region
        %s206 = ssub.s32 %s25, 1
        // Predicated region
        $region13: #{data_augmentation_v6_batch.1} parent=11 // pred_check
          %p207 = pneg %p114
        $region14: #{data_augmentation_v6_batch.1} parent=11 // pred_check_branch
          %209 = sbr.rel (%p207) target = $region16
        $region15: #{data_augmentation_v6_batch.1} parent=11 // pred_region
          %s211 = ssub.s32 256, 256
          %212 = vsyncadd [#allocation6], %s211
          %s213 = sshll.u32 [#allocation7], 4
          %s214 = int_to_ptr.vmem [resolvable:$true] %s213
          %219 = dma.hbm_to_vmem [thread:$0]  %s2, 256, %s214, [#allocation6], 64, 64, 4
        $region16: #{data_augmentation_v6_batch.1} parent=11 // pred_fallthru
          _
        // Predicated region
        $region17: #{data_augmentation_v6_batch.1} parent=11 // pred_check
          %p220 = pneg %p140
        $region18: #{data_augmentation_v6_batch.1} parent=11 // pred_check_branch
          %222 = sbr.rel (%p220) target = $region20
        $region19: #{data_augmentation_v6_batch.1} parent=11 // pred_region
          %s224 = ssub.s32 512, 512
          %225 = vsyncadd [#allocation9], %s224
          %s226 = smul.addr %s35, 128
          %s227 = scalar_lea.hbm %s3, %s226
          %s228 = sshll.u32 [#allocation8], 4
          %s229 = int_to_ptr.vmem [resolvable:$true] %s228
          %234 = dma.hbm_to_vmem [thread:$0]  %s227, 512, %s229, [#allocation9], 128, 128, 8
        $region20: #{data_augmentation_v6_batch.1} parent=11 // pred_fallthru
          _
      $region12: #{data_augmentation_v6_batch.1} parent=5 // pred_fallthru
        _
      %p235 = scmp.lt.s32.totalorder %s25, 2
      // Predicated region
      $region21: #{data_augmentation_v6_batch.1} parent=5 // pred_check
        %p236 = pneg %p235
      $region22: #{data_augmentation_v6_batch.1} parent=5 // pred_check_branch
        %238 = sbr.rel (%p236) target = $region24
      $region23: #{data_augmentation_v6_batch.1} parent=5 // pred_region
        // Predicated region
        $region25: #{data_augmentation_v6_batch.1} parent=23 // pred_check
          %p239 = pneg %p59
        $region26: #{data_augmentation_v6_batch.1} parent=23 // pred_check_branch
          %241 = sbr.rel (%p239) target = $region28
        $region27: #{data_augmentation_v6_batch.1} parent=23 // pred_region
          %s242 = sand.u32 %s49, 1
          %s243 = scalar_lea.sflag [#allocation3], %s242
          %s244 = sand.u32 %s49, 1
          %s245 = smul.addr %s244, 24
          %s246 = scalar_lea.vmem [#allocation2], %s245
          %s248 = ssub.s32 384, 384
          %249 = vsyncadd %s243, %s248
          %s250 = smul.addr %s32, 3
          %s251 = sadd.s32 %s33, %s250
          %s252 = smul.addr %s251, 128
          %s253 = scalar_lea.hbm %s0, %s252
          %s254 = sshll.u32 %s246, 4
          %s255 = int_to_ptr.vmem [resolvable:$true] %s254
          %260 = dma.hbm_to_vmem [thread:$0]  %s253, 384, %s255, %s243, 128, 128, 8
        $region28: #{data_augmentation_v6_batch.1} parent=23 // pred_fallthru
          _
        // Predicated region
        $region29: #{data_augmentation_v6_batch.1} parent=23 // pred_check
          %p261 = pneg %p87
        $region30: #{data_augmentation_v6_batch.1} parent=23 // pred_check_branch
          %263 = sbr.rel (%p261) target = $region32
        $region31: #{data_augmentation_v6_batch.1} parent=23 // pred_region
          %s264 = sand.u32 %s25, 1
          %s265 = scalar_lea.sflag [#allocation6], %s264
          %s266 = sand.u32 %s77, 1
          %s267 = smul.addr %s266, 8
          %s268 = scalar_lea.vmem [#allocation5], %s267
          %s270 = ssub.s32 128, 128
          %271 = vsyncadd %s265, %s270
          %s272 = sadd.s32 %s33, %s32
          %s273 = smul.addr %s272, 128
          %s274 = scalar_lea.hbm %s1, %s273
          %s276 = sshll.u32 %s268, 4
          %s277 = int_to_ptr.vmem [resolvable:$true] %s276
          %279 = dma.hbm_to_vmem [thread:$0]  %s274, 128, %s277, %s265
        $region32: #{data_augmentation_v6_batch.1} parent=23 // pred_fallthru
          _
      $region24: #{data_augmentation_v6_batch.1} parent=5 // pred_fallthru
        _
      %p280 = scmp.le.s32.totalorder 1, %s25
      %p281 = scmp.lt.s32.totalorder %s25, 3
      %p282 = pnand %p280, %p281
      %p283 = pneg %p282
      // Predicated region
      $region33: #{data_augmentation_v6_batch.1} parent=5 // pred_check
        _
      $region34: #{data_augmentation_v6_batch.1} parent=5 // pred_check_branch
        %285 = sbr.rel (%p282) target = $region36
      $region35: #{data_augmentation_v6_batch.1} parent=5 // pred_region
        %s286 = ssub.s32 %s25, 1
        %s287 = sand.u32 %s52, 1
        %s288 = scalar_lea.sflag [#allocation3], %s287
        %s289 = sand.u32 %s52, 1
        %s290 = smul.addr %s289, 24
        %s291 = scalar_lea.vmem [#allocation2], %s290
        // Predicated region
        $region37: #{data_augmentation_v6_batch.1} parent=35 // pred_check
          %p292 = pneg %p65
        $region38: #{data_augmentation_v6_batch.1} parent=35 // pred_check_branch
          %294 = sbr.rel (%p292) target = $region40
        $region39: #{data_augmentation_v6_batch.1} parent=35 // pred_region
          %295 = dma.done %s288, 384
        $region40: #{data_augmentation_v6_batch.1} parent=35 // pred_fallthru
          _
        %s296 = sand.u32 %s30, 1
        %s297 = scalar_lea.sflag [#allocation6], %s296
        %s298 = sand.u32 %s80, 1
        %s299 = smul.addr %s298, 8
        %s300 = scalar_lea.vmem [#allocation5], %s299
        // Predicated region
        $region41: #{data_augmentation_v6_batch.1} parent=35 // pred_check
          %p301 = pneg %p93
        $region42: #{data_augmentation_v6_batch.1} parent=35 // pred_check_branch
          %303 = sbr.rel (%p301) target = $region44
        $region43: #{data_augmentation_v6_batch.1} parent=35 // pred_region
          %304 = dma.done %s297, 128
        $region44: #{data_augmentation_v6_batch.1} parent=35 // pred_fallthru
          _
        // Predicated region
        $region45: #{data_augmentation_v6_batch.1} parent=35 // pred_check
          %p305 = pneg %p114
        $region46: #{data_augmentation_v6_batch.1} parent=35 // pred_check_branch
          %307 = sbr.rel (%p305) target = $region48
        $region47: #{data_augmentation_v6_batch.1} parent=35 // pred_region
          %308 = dma.done [#allocation6], 256
        $region48: #{data_augmentation_v6_batch.1} parent=35 // pred_fallthru
          _
        // Predicated region
        $region49: #{data_augmentation_v6_batch.1} parent=35 // pred_check
          %p309 = pneg %p140
        $region50: #{data_augmentation_v6_batch.1} parent=35 // pred_check_branch
          %311 = sbr.rel (%p309) target = $region52
        $region51: #{data_augmentation_v6_batch.1} parent=35 // pred_region
          %312 = dma.done [#allocation9], 512
        $region52: #{data_augmentation_v6_batch.1} parent=35 // pred_fallthru
          _
        %s313 = sand.u32 %s52, 1
        %s314 = scalar_lea.sflag [#allocation3], %s313
        %s315 = sand.u32 %s52, 1
        %s316 = smul.addr %s315, 24
        %s317 = scalar_lea.vmem [#allocation2], %s316
        %p318 = pneg %p65
        %p319 = pneg %p62
        %s320 = sand.u32 %s30, 1
        %s321 = scalar_lea.sflag [#allocation6], %s320
        %s322 = sand.u32 %s80, 1
        %s323 = smul.addr %s322, 8
        %s324 = scalar_lea.vmem [#allocation5], %s323
        %p325 = pneg %p93
        %p326 = pneg %p90
        %p327 = pneg %p114
        %p328 = pneg %p111
        %p329 = pneg %p140
        %p330 = pneg %p137
        %p331 = pneg %p166
        %p332 = pneg %p163
        %s333 = sand.u32 %s153, 1
        %s334 = scalar_lea.sflag [#allocation4], %s333
        %s335 = sand.u32 %s153, 1
        %s336 = smul.addr %s335, 48
        %s337 = scalar_lea.vmem [#allocation10], %s336
        %p338 = pneg %p192
        %p339 = pneg %p189
        %s340 = sand.u32 %s179, 1
        %s341 = scalar_lea.sflag [#allocation12], %s340
        %s342 = sand.u32 %s179, 1
        %s343 = smul.addr %s342, 16
        %s344 = scalar_lea.vmem [#allocation11], %s343
        %p346 = scmp.eq.s32.totalorder %s35, 0
        // Predicated region
        $region53: #{data_augmentation_v6_batch.1} parent=35 // pred_check
          %p347 = pneg %p346
        $region54: #{data_augmentation_v6_batch.1} parent=35 // pred_check_branch
          %349 = sbr.rel (%p347) target = $region56
        $region55: #{data_augmentation_v6_batch.1} parent=35 // pred_region
          %vm350 = vcmask 130048
          %351 = vst.msk [vmem:[%s337] sm:$0xff] %vm350, -1.0
          %352 = vst.msk [vmem:[%s337 + $0x8] sm:$0xff] %vm350, -1.0
          %353 = vst.msk [vmem:[%s337 + $0x10] sm:$0xff] %vm350, -1.0
          %354 = vst.msk [vmem:[%s337 + $0x18] sm:$0xff] %vm350, -1.0
          %355 = vst.msk [vmem:[%s337 + $0x20] sm:$0xff] %vm350, -1.0
          %356 = vst.msk [vmem:[%s337 + $0x28] sm:$0xff] %vm350, -1.0
          %357 = vst.msk [vmem:[%s344] sm:$0xff] %vm350, 0.0
          %358 = vst.msk [vmem:[%s344 + $0x8] sm:$0xff] %vm350, 0.0
        $region56: #{data_augmentation_v6_batch.1} parent=35 // pred_fallthru
          _
        %v359 = vld [vmem:[#allocation7] sm:$0xf]
        %v360 = vld [vmem:[#allocation7 + $0x4] sm:$0xf]
        %v361 = vld [vmem:[#allocation7 + $0x8] sm:$0xf]
        %v362 = vld [vmem:[#allocation7 + $0xc] sm:$0xf]
        %v363 = vld [vmem:[#allocation8] sm:$0xff]
        %v364 = vld [vmem:[#allocation8 + $0x8] sm:$0xff]
        %s365 = scalar_lea.vmem [#allocation8], 16
        %v366 = vld [vmem:[%s365] sm:$0xff]
        %v367 = vld [vmem:[%s365 + $0x8] sm:$0xff]
        %v368 = vld [vmem:[%s291] sm:$0xff]
        %v369 = vunpack.c.l.u8.bf16 %v368
        %v370 = vunpack.c.h.u8.bf16 %v368
        %v375 = vunpack.c.l.b16 %v359
        %v376 = vunpack.c.l.b16 %v360
        %v377 = vunpack.c.l.b16 %v361
        %v378 = vunpack.c.l.b16 %v362
        %v379 = vpack.c.b16 %v376, %v375
        %v380 = vpack.c.b16 %v378, %v377
        %vm383 = vcmask 261120
        %v385 = vsel %vm383, %v369, 0
        %v388 = vsel %vm383, %v370, 0
        %390 = vmatprep.subr.bf16.mxu0 0
        %391 = vmatpush1.bf16.msra.mxu0 0
        %392 = vmatprep.subr.bf16.mxu0 0
        %393 = vmatpush1.bf16.msra.mxu0 0
        %394 = vmatprep.subr.bf16.mxu0 0
        %395 = vmatpush1.bf16.msra.mxu0 0
        %396 = vmatprep.subr.bf16.mxu0 0
        %397 = vmatpush1.bf16.msra.mxu0 0
        %398 = vmatprep.subr.bf16.mxu0 0
        %399 = vmatpush1.bf16.msra.mxu0 0
        %400 = vmatprep.subr.bf16.mxu0 0
        %401 = vmatpush1.bf16.msra.mxu0 0
        %402 = vmatprep.subr.bf16.mxu0 0
        %403 = vmatpush1.bf16.msra.mxu0 %v380
        %404 = vmatprep.subr.bf16.mxu0 0
        %405 = vmatpush1.bf16.msra.mxu0 %v379
        %406 = vmatprep.subr.bf16.mxu0 0
        %407 = vmatpush2.bf16.msra.mxu0 0
        %408 = vmatprep.subr.bf16.mxu0 0
        %409 = vmatpush2.bf16.msra.mxu0 0
        %410 = vmatprep.subr.bf16.mxu0 0
        %411 = vmatpush2.bf16.msra.mxu0 0
        %412 = vmatprep.subr.bf16.mxu0 0
        %413 = vmatpush2.bf16.msra.mxu0 0
        %414 = vmatprep.subr.bf16.mxu0 0
        %415 = vmatpush2.bf16.msra.mxu0 0
        %416 = vmatprep.subr.bf16.mxu0 0
        %417 = vmatpush2.bf16.msra.mxu0 0
        %418 = vmatprep.subr.bf16.mxu0 0
        %419 = vmatpush2.bf16.msra.mxu0 0
        %420 = vmatprep.subr.bf16.mxu0 0
        %421 = vmatpush2.bf16.msra.mxu0 0
        %422 = vmatprep.mubr.bf16.mxu0 0
        %423 = vmatmul.mubr.bf16.gmra.mxu0 %v385
        %v424 = vpop.f32.mrf.mxu0
        %v425 = vadd.f32 0.0, %v424
        %v426 = vpop.f32.mrf.mxu0
        %v427 = vpop.f32.mrf.mxu0
        %v428 = vadd.f32 0.0, %v427
        %v429 = vpop.f32.mrf.mxu0
        %430 = vmatprep.mubr.bf16.mxu0 0
        %431 = vmatmul.mubr.bf16.gmra.mxu0 %v388
        %v432 = vpop.f32.mrf.mxu0
        %v433 = vadd.f32 0.0, %v432
        %v434 = vpop.f32.mrf.mxu0
        %v435 = vpop.f32.mrf.mxu0
        %v436 = vadd.f32 0.0, %v435
        %v437 = vpop.f32.mrf.mxu0
        %438 = vdwg.mxu0
        %v439 = vld [vmem:[%s337] sm:$0xff]
        %v440 = vld [vmem:[%s337 + $0x8] sm:$0xff]
        %v442 = vsel %vm383, %v363, 0
        %v445 = vsel %vm383, %v364, 0
        %447 = vmatprep.subr.mxu0 0.0
        %448 = vmatpush1.msra.mxu0 0.0
        %449 = vmatprep.subr.mxu0 0.0
        %450 = vmatpush1.msra.mxu0 0.0
        %451 = vmatprep.subr.mxu0 0.0
        %452 = vmatpush1.msra.mxu0 0.0
        %453 = vmatprep.subr.mxu0 0.0
        %454 = vmatpush1.msra.mxu0 0.0
        %455 = vmatprep.subr.mxu0 0.0
        %456 = vmatpush1.msra.mxu0 0.0
        %457 = vmatprep.subr.mxu0 0.0
        %458 = vmatpush1.msra.mxu0 0.0
        %459 = vmatprep.subr.mxu0 0.0
        %460 = vmatpush1.msra.mxu0 0.0
        %461 = vmatprep.subr.mxu0 0.0
        %462 = vmatpush1.msra.mxu0 0.0
        %463 = vmatprep.subr.mxu0 0.0
        %464 = vmatpush1.msra.mxu0 0.0
        %465 = vmatprep.subr.mxu0 0.0
        %466 = vmatpush1.msra.mxu0 0.0
        %467 = vmatprep.subr.mxu0 0.0
        %468 = vmatpush1.msra.mxu0 0.0
        %469 = vmatprep.subr.mxu0 0.0
        %470 = vmatpush1.msra.mxu0 0.0
        %471 = vmatprep.subr.mxu0 0.0
        %472 = vmatpush1.msra.mxu0 %v436
        %473 = vmatprep.subr.mxu0 0.0
        %474 = vmatpush1.msra.mxu0 %v433
        %475 = vmatprep.subr.mxu0 0.0
        %476 = vmatpush1.msra.mxu0 %v428
        %477 = vmatprep.subr.mxu0 0.0
        %478 = vmatpush1.msra.mxu0 %v425
        %479 = vmatprep.subr.mxu0 0.0
        %480 = vmatpush2.msra.mxu0 0.0
        %481 = vmatprep.subr.mxu0 0.0
        %482 = vmatpush2.msra.mxu0 0.0
        %483 = vmatprep.subr.mxu0 0.0
        %484 = vmatpush2.msra.mxu0 0.0
        %485 = vmatprep.subr.mxu0 0.0
        %486 = vmatpush2.msra.mxu0 0.0
        %487 = vmatprep.subr.mxu0 0.0
        %488 = vmatpush2.msra.mxu0 0.0
        %489 = vmatprep.subr.mxu0 0.0
        %490 = vmatpush2.msra.mxu0 0.0
        %491 = vmatprep.subr.mxu0 0.0
        %492 = vmatpush2.msra.mxu0 0.0
        %493 = vmatprep.subr.mxu0 0.0
        %494 = vmatpush2.msra.mxu0 0.0
        %495 = vmatprep.subr.mxu0 0.0
        %496 = vmatpush2.msra.mxu0 0.0
        %497 = vmatprep.subr.mxu0 0.0
        %498 = vmatpush2.msra.mxu0 0.0
        %499 = vmatprep.subr.mxu0 0.0
        %500 = vmatpush2.msra.mxu0 0.0
        %501 = vmatprep.subr.mxu0 0.0
        %502 = vmatpush2.msra.mxu0 0.0
        %503 = vmatprep.subr.mxu0 0.0
        %504 = vmatpush2.msra.mxu0 0.0
        %505 = vmatprep.subr.mxu0 0.0
        %506 = vmatpush2.msra.mxu0 0.0
        %507 = vmatprep.subr.mxu0 0.0
        %508 = vmatpush2.msra.mxu0 0.0
        %509 = vmatprep.subr.mxu0 0.0
        %510 = vmatpush2.msra.mxu0 0.0
        %511 = vmatprep.mubr.f32.mxu0 0.0
        %512 = vmatmul.mubr.f32.gmra.mxu0 %v442
        %v513 = vpop.f32.mrf.mxu0
        %v514 = vadd.f32 0.0, %v513
        %v515 = vpop.f32.mrf.mxu0
        %516 = vmatprep.mubr.f32.mxu0 0.0
        %517 = vmatmul.mubr.f32.gmra.mxu0 %v445
        %v518 = vpop.f32.mrf.mxu0
        %v519 = vadd.f32 0.0, %v518
        %v520 = vpop.f32.mrf.mxu0
        %521 = vdwg.mxu0
        %v522 = vadd.f32 %v439, %v514
        %v523 = vadd.f32 %v440, %v519
        %vm524 = vcmask 130048
        %525 = vst.msk [vmem:[%s337] sm:$0xff] %vm524, %v522
        %526 = vst.msk [vmem:[%s337 + $0x8] sm:$0xff] %vm524, %v523
        %s527 = scalar_lea.vmem %s291, 8 [#allocation2]
        %v528 = vld [vmem:[%s527] sm:$0xff]
        %v529 = vunpack.c.l.u8.bf16 %v528
        %v530 = vunpack.c.h.u8.bf16 %v528
        %v532 = vsel %vm383, %v529, 0
        %v535 = vsel %vm383, %v530, 0
        %537 = vmatprep.subr.bf16.mxu0 0
        %538 = vmatpush1.bf16.msra.mxu0 0
        %539 = vmatprep.subr.bf16.mxu0 0
        %540 = vmatpush1.bf16.msra.mxu0 0
        %541 = vmatprep.subr.bf16.mxu0 0
        %542 = vmatpush1.bf16.msra.mxu0 0
        %543 = vmatprep.subr.bf16.mxu0 0
        %544 = vmatpush1.bf16.msra.mxu0 0
        %545 = vmatprep.subr.bf16.mxu0 0
        %546 = vmatpush1.bf16.msra.mxu0 0
        %547 = vmatprep.subr.bf16.mxu0 0
        %548 = vmatpush1.bf16.msra.mxu0 0
        %549 = vmatprep.subr.bf16.mxu0 0
        %550 = vmatpush1.bf16.msra.mxu0 %v380
        %551 = vmatprep.subr.bf16.mxu0 0
        %552 = vmatpush1.bf16.msra.mxu0 %v379
        %553 = vmatprep.subr.bf16.mxu0 0
        %554 = vmatpush2.bf16.msra.mxu0 0
        %555 = vmatprep.subr.bf16.mxu0 0
        %556 = vmatpush2.bf16.msra.mxu0 0
        %557 = vmatprep.subr.bf16.mxu0 0
        %558 = vmatpush2.bf16.msra.mxu0 0
        %559 = vmatprep.subr.bf16.mxu0 0
        %560 = vmatpush2.bf16.msra.mxu0 0
        %561 = vmatprep.subr.bf16.mxu0 0
        %562 = vmatpush2.bf16.msra.mxu0 0
        %563 = vmatprep.subr.bf16.mxu0 0
        %564 = vmatpush2.bf16.msra.mxu0 0
        %565 = vmatprep.subr.bf16.mxu0 0
        %566 = vmatpush2.bf16.msra.mxu0 0
        %567 = vmatprep.subr.bf16.mxu0 0
        %568 = vmatpush2.bf16.msra.mxu0 0
        %569 = vmatprep.mubr.bf16.mxu0 0
        %570 = vmatmul.mubr.bf16.gmra.mxu0 %v532
        %v571 = vpop.f32.mrf.mxu0
        %v572 = vadd.f32 0.0, %v571
        %v573 = vpop.f32.mrf.mxu0
        %v574 = vpop.f32.mrf.mxu0
        %v575 = vadd.f32 0.0, %v574
        %v576 = vpop.f32.mrf.mxu0
        %577 = vmatprep.mubr.bf16.mxu0 0
        %578 = vmatmul.mubr.bf16.gmra.mxu0 %v535
        %v579 = vpop.f32.mrf.mxu0
        %v580 = vadd.f32 0.0, %v579
        %v581 = vpop.f32.mrf.mxu0
        %v582 = vpop.f32.mrf.mxu0
        %v583 = vadd.f32 0.0, %v582
        %v584 = vpop.f32.mrf.mxu0
        %585 = vdwg.mxu0
        %s586 = scalar_lea.vmem %s337, 16 [#allocation10]
        %v587 = vld [vmem:[%s586] sm:$0xff]
        %v588 = vld [vmem:[%s586 + $0x8] sm:$0xff]
        %589 = vmatprep.subr.mxu0 0.0
        %590 = vmatpush1.msra.mxu0 0.0
        %591 = vmatprep.subr.mxu0 0.0
        %592 = vmatpush1.msra.mxu0 0.0
        %593 = vmatprep.subr.mxu0 0.0
        %594 = vmatpush1.msra.mxu0 0.0
        %595 = vmatprep.subr.mxu0 0.0
        %596 = vmatpush1.msra.mxu0 0.0
        %597 = vmatprep.subr.mxu0 0.0
        %598 = vmatpush1.msra.mxu0 0.0
        %599 = vmatprep.subr.mxu0 0.0
        %600 = vmatpush1.msra.mxu0 0.0
        %601 = vmatprep.subr.mxu0 0.0
        %602 = vmatpush1.msra.mxu0 0.0
        %603 = vmatprep.subr.mxu0 0.0
        %604 = vmatpush1.msra.mxu0 0.0
        %605 = vmatprep.subr.mxu0 0.0
        %606 = vmatpush1.msra.mxu0 0.0
        %607 = vmatprep.subr.mxu0 0.0
        %608 = vmatpush1.msra.mxu0 0.0
        %609 = vmatprep.subr.mxu0 0.0
        %610 = vmatpush1.msra.mxu0 0.0
        %611 = vmatprep.subr.mxu0 0.0
        %612 = vmatpush1.msra.mxu0 0.0
        %613 = vmatprep.subr.mxu0 0.0
        %614 = vmatpush1.msra.mxu0 %v583
        %615 = vmatprep.subr.mxu0 0.0
        %616 = vmatpush1.msra.mxu0 %v580
        %617 = vmatprep.subr.mxu0 0.0
        %618 = vmatpush1.msra.mxu0 %v575
        %619 = vmatprep.subr.mxu0 0.0
        %620 = vmatpush1.msra.mxu0 %v572
        %621 = vmatprep.subr.mxu0 0.0
        %622 = vmatpush2.msra.mxu0 0.0
        %623 = vmatprep.subr.mxu0 0.0
        %624 = vmatpush2.msra.mxu0 0.0
        %625 = vmatprep.subr.mxu0 0.0
        %626 = vmatpush2.msra.mxu0 0.0
        %627 = vmatprep.subr.mxu0 0.0
        %628 = vmatpush2.msra.mxu0 0.0
        %629 = vmatprep.subr.mxu0 0.0
        %630 = vmatpush2.msra.mxu0 0.0
        %631 = vmatprep.subr.mxu0 0.0
        %632 = vmatpush2.msra.mxu0 0.0
        %633 = vmatprep.subr.mxu0 0.0
        %634 = vmatpush2.msra.mxu0 0.0
        %635 = vmatprep.subr.mxu0 0.0
        %636 = vmatpush2.msra.mxu0 0.0
        %637 = vmatprep.subr.mxu0 0.0
        %638 = vmatpush2.msra.mxu0 0.0
        %639 = vmatprep.subr.mxu0 0.0
        %640 = vmatpush2.msra.mxu0 0.0
        %641 = vmatprep.subr.mxu0 0.0
        %642 = vmatpush2.msra.mxu0 0.0
        %643 = vmatprep.subr.mxu0 0.0
        %644 = vmatpush2.msra.mxu0 0.0
        %645 = vmatprep.subr.mxu0 0.0
        %646 = vmatpush2.msra.mxu0 0.0
        %647 = vmatprep.subr.mxu0 0.0
        %648 = vmatpush2.msra.mxu0 0.0
        %649 = vmatprep.subr.mxu0 0.0
        %650 = vmatpush2.msra.mxu0 0.0
        %651 = vmatprep.subr.mxu0 0.0
        %652 = vmatpush2.msra.mxu0 0.0
        %653 = vmatprep.mubr.f32.mxu0 0.0
        %654 = vmatmul.mubr.f32.gmra.mxu0 %v442
        %v655 = vpop.f32.mrf.mxu0
        %v656 = vadd.f32 0.0, %v655
        %v657 = vpop.f32.mrf.mxu0
        %658 = vmatprep.mubr.f32.mxu0 0.0
        %659 = vmatmul.mubr.f32.gmra.mxu0 %v445
        %v660 = vpop.f32.mrf.mxu0
        %v661 = vadd.f32 0.0, %v660
        %v662 = vpop.f32.mrf.mxu0
        %663 = vdwg.mxu0
        %v664 = vadd.f32 %v587, %v656
        %v665 = vadd.f32 %v588, %v661
        %666 = vst.msk [vmem:[%s586] sm:$0xff] %vm524, %v664
        %667 = vst.msk [vmem:[%s586 + $0x8] sm:$0xff] %vm524, %v665
        %s668 = scalar_lea.vmem %s291, 16 [#allocation2]
        %v669 = vld [vmem:[%s668] sm:$0xff]
        %v670 = vunpack.c.l.u8.bf16 %v669
        %v671 = vunpack.c.h.u8.bf16 %v669
        %v673 = vsel %vm383, %v670, 0
        %v676 = vsel %vm383, %v671, 0
        %678 = vmatprep.subr.bf16.mxu0 0
        %679 = vmatpush1.bf16.msra.mxu0 0
        %680 = vmatprep.subr.bf16.mxu0 0
        %681 = vmatpush1.bf16.msra.mxu0 0
        %682 = vmatprep.subr.bf16.mxu0 0
        %683 = vmatpush1.bf16.msra.mxu0 0
        %684 = vmatprep.subr.bf16.mxu0 0
        %685 = vmatpush1.bf16.msra.mxu0 0
        %686 = vmatprep.subr.bf16.mxu0 0
        %687 = vmatpush1.bf16.msra.mxu0 0
        %688 = vmatprep.subr.bf16.mxu0 0
        %689 = vmatpush1.bf16.msra.mxu0 0
        %690 = vmatprep.subr.bf16.mxu0 0
        %691 = vmatpush1.bf16.msra.mxu0 %v380
        %692 = vmatprep.subr.bf16.mxu0 0
        %693 = vmatpush1.bf16.msra.mxu0 %v379
        %694 = vmatprep.subr.bf16.mxu0 0
        %695 = vmatpush2.bf16.msra.mxu0 0
        %696 = vmatprep.subr.bf16.mxu0 0
        %697 = vmatpush2.bf16.msra.mxu0 0
        %698 = vmatprep.subr.bf16.mxu0 0
        %699 = vmatpush2.bf16.msra.mxu0 0
        %700 = vmatprep.subr.bf16.mxu0 0
        %701 = vmatpush2.bf16.msra.mxu0 0
        %702 = vmatprep.subr.bf16.mxu0 0
        %703 = vmatpush2.bf16.msra.mxu0 0
        %704 = vmatprep.subr.bf16.mxu0 0
        %705 = vmatpush2.bf16.msra.mxu0 0
        %706 = vmatprep.subr.bf16.mxu0 0
        %707 = vmatpush2.bf16.msra.mxu0 0
        %708 = vmatprep.subr.bf16.mxu0 0
        %709 = vmatpush2.bf16.msra.mxu0 0
        %710 = vmatprep.mubr.bf16.mxu0 0
        %711 = vmatmul.mubr.bf16.gmra.mxu0 %v673
        %v712 = vpop.f32.mrf.mxu0
        %v713 = vadd.f32 0.0, %v712
        %v714 = vpop.f32.mrf.mxu0
        %v715 = vpop.f32.mrf.mxu0
        %v716 = vadd.f32 0.0, %v715
        %v717 = vpop.f32.mrf.mxu0
        %718 = vmatprep.mubr.bf16.mxu0 0
        %719 = vmatmul.mubr.bf16.gmra.mxu0 %v676
        %v720 = vpop.f32.mrf.mxu0
        %v721 = vadd.f32 0.0, %v720
        %v722 = vpop.f32.mrf.mxu0
        %v723 = vpop.f32.mrf.mxu0
        %v724 = vadd.f32 0.0, %v723
        %v725 = vpop.f32.mrf.mxu0
        %726 = vdwg.mxu0
        %s727 = scalar_lea.vmem %s337, 32 [#allocation10]
        %v728 = vld [vmem:[%s727] sm:$0xff]
        %v729 = vld [vmem:[%s727 + $0x8] sm:$0xff]
        %730 = vmatprep.subr.mxu0 0.0
        %731 = vmatpush1.msra.mxu0 0.0
        %732 = vmatprep.subr.mxu0 0.0
        %733 = vmatpush1.msra.mxu0 0.0
        %734 = vmatprep.subr.mxu0 0.0
        %735 = vmatpush1.msra.mxu0 0.0
        %736 = vmatprep.subr.mxu0 0.0
        %737 = vmatpush1.msra.mxu0 0.0
        %738 = vmatprep.subr.mxu0 0.0
        %739 = vmatpush1.msra.mxu0 0.0
        %740 = vmatprep.subr.mxu0 0.0
        %741 = vmatpush1.msra.mxu0 0.0
        %742 = vmatprep.subr.mxu0 0.0
        %743 = vmatpush1.msra.mxu0 0.0
        %744 = vmatprep.subr.mxu0 0.0
        %745 = vmatpush1.msra.mxu0 0.0
        %746 = vmatprep.subr.mxu0 0.0
        %747 = vmatpush1.msra.mxu0 0.0
        %748 = vmatprep.subr.mxu0 0.0
        %749 = vmatpush1.msra.mxu0 0.0
        %750 = vmatprep.subr.mxu0 0.0
        %751 = vmatpush1.msra.mxu0 0.0
        %752 = vmatprep.subr.mxu0 0.0
        %753 = vmatpush1.msra.mxu0 0.0
        %754 = vmatprep.subr.mxu0 0.0
        %755 = vmatpush1.msra.mxu0 %v724
        %756 = vmatprep.subr.mxu0 0.0
        %757 = vmatpush1.msra.mxu0 %v721
        %758 = vmatprep.subr.mxu0 0.0
        %759 = vmatpush1.msra.mxu0 %v716
        %760 = vmatprep.subr.mxu0 0.0
        %761 = vmatpush1.msra.mxu0 %v713
        %762 = vmatprep.subr.mxu0 0.0
        %763 = vmatpush2.msra.mxu0 0.0
        %764 = vmatprep.subr.mxu0 0.0
        %765 = vmatpush2.msra.mxu0 0.0
        %766 = vmatprep.subr.mxu0 0.0
        %767 = vmatpush2.msra.mxu0 0.0
        %768 = vmatprep.subr.mxu0 0.0
        %769 = vmatpush2.msra.mxu0 0.0
        %770 = vmatprep.subr.mxu0 0.0
        %771 = vmatpush2.msra.mxu0 0.0
        %772 = vmatprep.subr.mxu0 0.0
        %773 = vmatpush2.msra.mxu0 0.0
        %774 = vmatprep.subr.mxu0 0.0
        %775 = vmatpush2.msra.mxu0 0.0
        %776 = vmatprep.subr.mxu0 0.0
        %777 = vmatpush2.msra.mxu0 0.0
        %778 = vmatprep.subr.mxu0 0.0
        %779 = vmatpush2.msra.mxu0 0.0
        %780 = vmatprep.subr.mxu0 0.0
        %781 = vmatpush2.msra.mxu0 0.0
        %782 = vmatprep.subr.mxu0 0.0
        %783 = vmatpush2.msra.mxu0 0.0
        %784 = vmatprep.subr.mxu0 0.0
        %785 = vmatpush2.msra.mxu0 0.0
        %786 = vmatprep.subr.mxu0 0.0
        %787 = vmatpush2.msra.mxu0 0.0
        %788 = vmatprep.subr.mxu0 0.0
        %789 = vmatpush2.msra.mxu0 0.0
        %790 = vmatprep.subr.mxu0 0.0
        %791 = vmatpush2.msra.mxu0 0.0
        %792 = vmatprep.subr.mxu0 0.0
        %793 = vmatpush2.msra.mxu0 0.0
        %794 = vmatprep.mubr.f32.mxu0 0.0
        %795 = vmatmul.mubr.f32.gmra.mxu0 %v442
        %v796 = vpop.f32.mrf.mxu0
        %v797 = vadd.f32 0.0, %v796
        %v798 = vpop.f32.mrf.mxu0
        %799 = vmatprep.mubr.f32.mxu0 0.0
        %800 = vmatmul.mubr.f32.gmra.mxu0 %v445
        %v801 = vpop.f32.mrf.mxu0
        %v802 = vadd.f32 0.0, %v801
        %v803 = vpop.f32.mrf.mxu0
        %804 = vdwg.mxu0
        %v805 = vadd.f32 %v728, %v797
        %v806 = vadd.f32 %v729, %v802
        %807 = vst.msk [vmem:[%s727] sm:$0xff] %vm524, %v805
        %808 = vst.msk [vmem:[%s727 + $0x8] sm:$0xff] %vm524, %v806
        %v809 = vld [vmem:[%s300] sm:$0xff]
        %v810 = vunpack.c.l.u8.bf16 %v809
        %v811 = vunpack.c.h.u8.bf16 %v809
        %v813 = vsel %vm383, %v810, 0
        %v816 = vsel %vm383, %v811, 0
        %818 = vmatprep.subr.bf16.mxu0 0
        %819 = vmatpush1.bf16.msra.mxu0 0
        %820 = vmatprep.subr.bf16.mxu0 0
        %821 = vmatpush1.bf16.msra.mxu0 0
        %822 = vmatprep.subr.bf16.mxu0 0
        %823 = vmatpush1.bf16.msra.mxu0 0
        %824 = vmatprep.subr.bf16.mxu0 0
        %825 = vmatpush1.bf16.msra.mxu0 0
        %826 = vmatprep.subr.bf16.mxu0 0
        %827 = vmatpush1.bf16.msra.mxu0 0
        %828 = vmatprep.subr.bf16.mxu0 0
        %829 = vmatpush1.bf16.msra.mxu0 0
        %830 = vmatprep.subr.bf16.mxu0 0
        %831 = vmatpush1.bf16.msra.mxu0 %v380
        %832 = vmatprep.subr.bf16.mxu0 0
        %833 = vmatpush1.bf16.msra.mxu0 %v379
        %834 = vmatprep.subr.bf16.mxu0 0
        %835 = vmatpush2.bf16.msra.mxu0 0
        %836 = vmatprep.subr.bf16.mxu0 0
        %837 = vmatpush2.bf16.msra.mxu0 0
        %838 = vmatprep.subr.bf16.mxu0 0
        %839 = vmatpush2.bf16.msra.mxu0 0
        %840 = vmatprep.subr.bf16.mxu0 0
        %841 = vmatpush2.bf16.msra.mxu0 0
        %842 = vmatprep.subr.bf16.mxu0 0
        %843 = vmatpush2.bf16.msra.mxu0 0
        %844 = vmatprep.subr.bf16.mxu0 0
        %845 = vmatpush2.bf16.msra.mxu0 0
        %846 = vmatprep.subr.bf16.mxu0 0
        %847 = vmatpush2.bf16.msra.mxu0 0
        %848 = vmatprep.subr.bf16.mxu0 0
        %849 = vmatpush2.bf16.msra.mxu0 0
        %850 = vmatprep.mubr.bf16.mxu0 0
        %851 = vmatmul.mubr.bf16.gmra.mxu0 %v813
        %v852 = vpop.f32.mrf.mxu0
        %v853 = vadd.f32 0.0, %v852
        %v854 = vpop.f32.mrf.mxu0
        %v855 = vpop.f32.mrf.mxu0
        %v856 = vadd.f32 0.0, %v855
        %v857 = vpop.f32.mrf.mxu0
        %858 = vmatprep.mubr.bf16.mxu0 0
        %859 = vmatmul.mubr.bf16.gmra.mxu0 %v816
        %v860 = vpop.f32.mrf.mxu0
        %v861 = vadd.f32 0.0, %v860
        %v862 = vpop.f32.mrf.mxu0
        %v863 = vpop.f32.mrf.mxu0
        %v864 = vadd.f32 0.0, %v863
        %v865 = vpop.f32.mrf.mxu0
        %866 = vdwg.mxu0
        %v867 = vld [vmem:[%s344] sm:$0xff]
        %v868 = vld [vmem:[%s344 + $0x8] sm:$0xff]
        %v870 = vsel %vm383, %v366, 0
        %v873 = vsel %vm383, %v367, 0
        %875 = vmatprep.subr.mxu0 0.0
        %876 = vmatpush1.msra.mxu0 0.0
        %877 = vmatprep.subr.mxu0 0.0
        %878 = vmatpush1.msra.mxu0 0.0
        %879 = vmatprep.subr.mxu0 0.0
        %880 = vmatpush1.msra.mxu0 0.0
        %881 = vmatprep.subr.mxu0 0.0
        %882 = vmatpush1.msra.mxu0 0.0
        %883 = vmatprep.subr.mxu0 0.0
        %884 = vmatpush1.msra.mxu0 0.0
        %885 = vmatprep.subr.mxu0 0.0
        %886 = vmatpush1.msra.mxu0 0.0
        %887 = vmatprep.subr.mxu0 0.0
        %888 = vmatpush1.msra.mxu0 0.0
        %889 = vmatprep.subr.mxu0 0.0
        %890 = vmatpush1.msra.mxu0 0.0
        %891 = vmatprep.subr.mxu0 0.0
        %892 = vmatpush1.msra.mxu0 0.0
        %893 = vmatprep.subr.mxu0 0.0
        %894 = vmatpush1.msra.mxu0 0.0
        %895 = vmatprep.subr.mxu0 0.0
        %896 = vmatpush1.msra.mxu0 0.0
        %897 = vmatprep.subr.mxu0 0.0
        %898 = vmatpush1.msra.mxu0 0.0
        %899 = vmatprep.subr.mxu0 0.0
        %900 = vmatpush1.msra.mxu0 %v864
        %901 = vmatprep.subr.mxu0 0.0
        %902 = vmatpush1.msra.mxu0 %v861
        %903 = vmatprep.subr.mxu0 0.0
        %904 = vmatpush1.msra.mxu0 %v856
        %905 = vmatprep.subr.mxu0 0.0
        %906 = vmatpush1.msra.mxu0 %v853
        %907 = vmatprep.subr.mxu0 0.0
        %908 = vmatpush2.msra.mxu0 0.0
        %909 = vmatprep.subr.mxu0 0.0
        %910 = vmatpush2.msra.mxu0 0.0
        %911 = vmatprep.subr.mxu0 0.0
        %912 = vmatpush2.msra.mxu0 0.0
        %913 = vmatprep.subr.mxu0 0.0
        %914 = vmatpush2.msra.mxu0 0.0
        %915 = vmatprep.subr.mxu0 0.0
        %916 = vmatpush2.msra.mxu0 0.0
        %917 = vmatprep.subr.mxu0 0.0
        %918 = vmatpush2.msra.mxu0 0.0
        %919 = vmatprep.subr.mxu0 0.0
        %920 = vmatpush2.msra.mxu0 0.0
        %921 = vmatprep.subr.mxu0 0.0
        %922 = vmatpush2.msra.mxu0 0.0
        %923 = vmatprep.subr.mxu0 0.0
        %924 = vmatpush2.msra.mxu0 0.0
        %925 = vmatprep.subr.mxu0 0.0
        %926 = vmatpush2.msra.mxu0 0.0
        %927 = vmatprep.subr.mxu0 0.0
        %928 = vmatpush2.msra.mxu0 0.0
        %929 = vmatprep.subr.mxu0 0.0
        %930 = vmatpush2.msra.mxu0 0.0
        %931 = vmatprep.subr.mxu0 0.0
        %932 = vmatpush2.msra.mxu0 0.0
        %933 = vmatprep.subr.mxu0 0.0
        %934 = vmatpush2.msra.mxu0 0.0
        %935 = vmatprep.subr.mxu0 0.0
        %936 = vmatpush2.msra.mxu0 0.0
        %937 = vmatprep.subr.mxu0 0.0
        %938 = vmatpush2.msra.mxu0 0.0
        %939 = vmatprep.mubr.f32.mxu0 0.0
        %940 = vmatmul.mubr.f32.gmra.mxu0 %v870
        %v941 = vpop.f32.mrf.mxu0
        %v942 = vadd.f32 0.0, %v941
        %v943 = vpop.f32.mrf.mxu0
        %944 = vmatprep.mubr.f32.mxu0 0.0
        %945 = vmatmul.mubr.f32.gmra.mxu0 %v873
        %v946 = vpop.f32.mrf.mxu0
        %v947 = vadd.f32 0.0, %v946
        %v948 = vpop.f32.mrf.mxu0
        %949 = vdwg.mxu0
        %v950 = vadd.f32 %v867, %v942
        %v951 = vadd.f32 %v868, %v947
        %952 = vst.msk [vmem:[%s344] sm:$0xff] %vm524, %v950
        %953 = vst.msk [vmem:[%s344 + $0x8] sm:$0xff] %vm524, %v951
        %s954 = sand.u32 %s153, 1
        %s955 = scalar_lea.sflag [#allocation4], %s954
        %s956 = sand.u32 %s153, 1
        %s957 = smul.addr %s956, 48
        %s958 = scalar_lea.vmem [#allocation10], %s957
        %s959 = sand.u32 %s179, 1
        %s960 = scalar_lea.sflag [#allocation12], %s959
        %s961 = sand.u32 %s179, 1
        %s962 = smul.addr %s961, 16
        %s963 = scalar_lea.vmem [#allocation11], %s962
        // Predicated region
        $region57: #{data_augmentation_v6_batch.1} parent=35 // pred_check
          %p964 = pneg %p163
        $region58: #{data_augmentation_v6_batch.1} parent=35 // pred_check_branch
          %966 = sbr.rel (%p964) target = $region60
        $region59: #{data_augmentation_v6_batch.1} parent=35 // pred_region
          %s968 = ssub.s32 768, 768
          %969 = vsyncadd %s955, %s968
          %s970 = smul.addr %s34, 6
          %s971 = smul.addr %s970, 128
          %s972 = scalar_lea.hbm %s4, %s971
          %s973 = sshll.u32 %s958, 4
          %s974 = int_to_ptr.vmem [resolvable:$true] %s973
          %979 = dma.vmem_to_hbm [thread:$0]  %s974, 768, %s972, %s955, 128, 128, 8
        $region60: #{data_augmentation_v6_batch.1} parent=35 // pred_fallthru
          _
        // Predicated region
        $region61: #{data_augmentation_v6_batch.1} parent=35 // pred_check
          %p980 = pneg %p189
        $region62: #{data_augmentation_v6_batch.1} parent=35 // pred_check_branch
          %982 = sbr.rel (%p980) target = $region64
        $region63: #{data_augmentation_v6_batch.1} parent=35 // pred_region
          %s984 = ssub.s32 256, 256
          %985 = vsyncadd %s960, %s984
          %s986 = smul.addr %s34, 2
          %s987 = smul.addr %s986, 128
          %s988 = scalar_lea.hbm %s5, %s987
          %s989 = sshll.u32 %s963, 4
          %s990 = int_to_ptr.vmem [resolvable:$true] %s989
          %995 = dma.vmem_to_hbm [thread:$0]  %s990, 256, %s988, %s960, 128, 128, 8
        $region64: #{data_augmentation_v6_batch.1} parent=35 // pred_fallthru
          _
      $region36: #{data_augmentation_v6_batch.1} parent=5 // pred_fallthru
        _
      %p996 = scmp.le.s32.totalorder 2, %s25
      // Predicated region
      $region65: #{data_augmentation_v6_batch.1} parent=5 // pred_check
        %p997 = pneg %p996
      $region66: #{data_augmentation_v6_batch.1} parent=5 // pred_check_branch
        %999 = sbr.rel (%p997) target = $region68
      $region67: #{data_augmentation_v6_batch.1} parent=5 // pred_region
        %s1000 = ssub.s32 %s25, 2
        // Predicated region
        $region69: #{data_augmentation_v6_batch.1} parent=67 // pred_check
          %p1001 = pneg %p169
        $region70: #{data_augmentation_v6_batch.1} parent=67 // pred_check_branch
          %1003 = sbr.rel (%p1001) target = $region72
        $region71: #{data_augmentation_v6_batch.1} parent=67 // pred_region
          %s1004 = sand.u32 %s154, 1
          %s1005 = scalar_lea.sflag [#allocation4], %s1004
          %s1006 = sand.u32 %s154, 1
          %s1007 = smul.addr %s1006, 48
          %s1008 = scalar_lea.vmem [#allocation10], %s1007
          %1009 = dma.done %s1005, 768
        $region72: #{data_augmentation_v6_batch.1} parent=67 // pred_fallthru
          _
        // Predicated region
        $region73: #{data_augmentation_v6_batch.1} parent=67 // pred_check
          %p1010 = pneg %p195
        $region74: #{data_augmentation_v6_batch.1} parent=67 // pred_check_branch
          %1012 = sbr.rel (%p1010) target = $region76
        $region75: #{data_augmentation_v6_batch.1} parent=67 // pred_region
          %s1013 = sand.u32 %s180, 1
          %s1014 = scalar_lea.sflag [#allocation12], %s1013
          %s1015 = sand.u32 %s180, 1
          %s1016 = smul.addr %s1015, 16
          %s1017 = scalar_lea.vmem [#allocation11], %s1016
          %1018 = dma.done %s1014, 256
        $region76: #{data_augmentation_v6_batch.1} parent=67 // pred_fallthru
          _
      $region68: #{data_augmentation_v6_batch.1} parent=5 // pred_fallthru
        _
    $region6: #{data_augmentation_v6_batch.1} parent=1 // loop_footer
      %s29 = sadd.s32 1, %s25
    $region7: #{data_augmentation_v6_batch.1} parent=1 // loop_footer_branch
      %24 = sbr.rel target = $region3
    $region8: #{data_augmentation_v6_batch.1} parent=1 // loop_exit
      _
    %1019 = vsyncpa [#allocation3], 1
    %s1020 = scalar_lea.sflag [#allocation3], 1
    %1021 = vsyncpa %s1020, 1
    %1022 = vsyncpa [#allocation6], 1
    %s1023 = scalar_lea.sflag [#allocation6], 1
    %1024 = vsyncpa %s1023, 1
    %1025 = vsyncpa [#allocation9], 1
    %1026 = vsyncpa [#allocation4], 1
    %s1027 = scalar_lea.sflag [#allocation4], 1
    %1028 = vsyncpa %s1027, 1
    %1029 = vsyncpa [#allocation12], 1
    %s1030 = scalar_lea.sflag [#allocation12], 1
    %1031 = vsyncpa %s1030, 1

</llo_original>
